<compile_context>
chip_gen: v5e
topology: v5e:2x2
jax: 0.10.0
libtpu: 0.0.40
codegen_flags: <defaults>
</compile_context>

<pallas_src>
import jax
import jax.numpy as jnp
from jax.experimental import pallas as pl
from jax.experimental.pallas import tpu as pltpu
import numpy as np


def _hadamard(depth: int) -> np.ndarray:
    """Sylvester Hadamard matrix, H[i,j] = (-1)^popcount(i & j)."""
    assert depth & (depth - 1) == 0, "depth must be a power of 2"
    i = np.arange(depth)
    popcnt = np.vectorize(lambda v: bin(v).count("1"))(i[:, None] & i[None, :])
    return np.where(popcnt % 2 == 0, 1.0, -1.0).astype(np.float32)


def _fastfood_kernel(x_ref, h1_ref, h2_ref, o_ref):
    # x tile: (tile_m, depth) bf16 ; H1/H2: (depth, depth) bf16 resident in VMEM
    # (constant index_map -> no re-DMA across grid steps).
    t = jnp.dot(x_ref[...], h1_ref[...], preferred_element_type=jnp.float32)
    t = jnp.dot(t.astype(h2_ref.dtype), h2_ref[...],
                preferred_element_type=jnp.float32)
    o_ref[...] = t.astype(o_ref.dtype)


def fastfood_forward(x, diag_b, diag_g, diag_s, h_mat, perm_mat, *,
                     tile_m=256, compute_dtype=jnp.bfloat16):
    """out = x @ diag(b) @ H @ P @ diag(g) @ H @ diag(s) / depth."""
    n, depth = x.shape
    assert h_mat.shape == (depth, depth) and perm_mat.shape == (depth, depth)
    assert tile_m % 8 == 0, "tile_m must be a multiple of 8 (sublane)"

    # --- fold the diagonals / permutation / 1/depth into two matrices --------
    # H1 = diag(b) @ H @ P ; H2 = diag(g) @ H @ diag(s/depth).  Entries are
    # +-1 times the learned scales; for the identity init they are exact in bf16.
    h1 = ((diag_b[:, None] * h_mat) @ perm_mat).astype(compute_dtype)
    h2 = (diag_g[:, None] * h_mat * (diag_s[None, :] / depth)).astype(compute_dtype)

    x_c = x.astype(compute_dtype)

    # --- pad batch to a multiple of tile_m (no silent row dropping) ----------
    n_tiles = pl.cdiv(n, tile_m)
    n_pad = n_tiles * tile_m
    if n_pad != n:
        x_c = jnp.pad(x_c, ((0, n_pad - n), (0, 0)))

    # --- explicit VMEM budget (stays well under v7x's 64 MiB) ----------------
    cbytes = jnp.dtype(compute_dtype).itemsize
    obytes = jnp.dtype(x.dtype).itemsize
    vmem_needed = (2 * tile_m * depth * cbytes        # x tile, double-buffered
                   + 2 * tile_m * depth * obytes      # out tile, double-buffered
                   + 2 * 2 * depth * depth * cbytes)  # H1 + H2 (worst case 2 bufs)
    vmem_limit = int(min(max(2 * vmem_needed, 8 << 20), 48 << 20))

    grid = (n_pad // tile_m,)
    out = pl.pallas_call(
        _fastfood_kernel,
        out_shape=jax.ShapeDtypeStruct((n_pad, depth), x.dtype),
        grid_spec=pltpu.PrefetchScalarGridSpec(
            num_scalar_prefetch=0,
            grid=grid,
            in_specs=[
                pl.BlockSpec((tile_m, depth), lambda i: (i, 0)),   # x rows tile
                pl.BlockSpec((depth, depth), lambda i: (0, 0)),    # H1 (resident)
                pl.BlockSpec((depth, depth), lambda i: (0, 0)),    # H2 (resident)
            ],
            out_specs=pl.BlockSpec((tile_m, depth), lambda i: (i, 0)),
        ),
        compiler_params=pltpu.CompilerParams(
            dimension_semantics=("parallel",),   # row tiles independent -> megacore
            vmem_limit_bytes=vmem_limit,
        ),
    )(x_c, h1, h2)
    return out[:n]


def fastfood_ref_f32(x, diag_b, diag_g, diag_s, h_mat, perm_mat):
    """Original (unfused) f32 math — semantic reference."""
    depth = x.shape[-1]
    t = x * diag_b[None, :]
    t = t @ h_mat
    t = t @ perm_mat
    t = t * diag_g[None, :]
    t = (t @ h_mat) / depth
    return t * diag_s[None, :]


def fastfood_ref_bf16(x, diag_b, diag_g, diag_s, h_mat, perm_mat, compute_dtype=jnp.bfloat16):
    """Same fused bf16 path as the kernel (for a tight numerical check)."""
    depth = x.shape[-1]
    h1 = ((diag_b[:, None] * h_mat) @ perm_mat).astype(compute_dtype)
    h2 = (diag_g[:, None] * h_mat * (diag_s[None, :] / depth)).astype(compute_dtype)
    t = jnp.dot(x.astype(compute_dtype), h1, preferred_element_type=jnp.float32)
    t = jnp.dot(t.astype(compute_dtype), h2, preferred_element_type=jnp.float32)
    return t.astype(x.dtype)


if __name__ == "__main__":
    depth = 128      # feature dim (power of 2, lane-aligned)
    batch = 300      # not a multiple of tile_m -> exercises padding path

    key = jax.random.PRNGKey(0)
    kx, kperm, kb, kg, ks = jax.random.split(key, 5)

    x = jax.random.normal(kx, (batch, depth), dtype=jnp.float32)

    # Learnable diag vectors (init to ones in the module; use small random
    # perturbations here so the fold is exercised non-trivially).
    diag_b = 1.0 + 0.1 * jax.random.normal(kb, (depth,), jnp.float32)
    diag_g = 1.0 + 0.1 * jax.random.normal(kg, (depth,), jnp.float32)
    diag_s = 1.0 + 0.1 * jax.random.normal(ks, (depth,), jnp.float32)

    # Fixed random permutation matrix (rows of eye permuted, as in the module).
    perm_idx = jax.random.permutation(kperm, depth)
    perm_mat = jnp.eye(depth, dtype=jnp.float32)[perm_idx]

    h_mat = jnp.asarray(_hadamard(depth))

    out = fastfood_forward(x, diag_b, diag_g, diag_s, h_mat, perm_mat,
                           tile_m=256)
    out = jax.block_until_ready(out)
    assert out.shape == (batch, depth)

    # Tight check against the identical fused bf16 path.
    ref_bf16 = fastfood_ref_bf16(x, diag_b, diag_g, diag_s, h_mat, perm_mat)
    assert jnp.allclose(out, ref_bf16, atol=1e-4, rtol=1e-4), \
        "mismatch vs fused bf16 reference"

    # Loose check against the original unfused f32 semantics (bf16 rounding of
    # the x tile / intermediate is the only source of error).
    ref_f32 = fastfood_ref_f32(x, diag_b, diag_g, diag_s, h_mat, perm_mat)
    assert jnp.allclose(out, ref_f32, atol=3e-2, rtol=3e-2), \
        "mismatch vs f32 reference"

    print("KERNEL_OK")
</pallas_src>

<mosaic_0001>
module attributes {stable_mosaic.version = 11 : i64} {
  func.func @_fastfood_kernel(%arg0: i32, %arg1: memref<256x128xbf16, #tpu.memory_space<vmem>>, %arg2: memref<128x128xbf16, #tpu.memory_space<vmem>>, %arg3: memref<128x128xbf16, #tpu.memory_space<vmem>>, %arg4: memref<256x128xf32, #tpu.memory_space<vmem>>) attributes {dimension_semantics = [#tpu.dimension_semantics<parallel>], iteration_bounds = array<i64: 2>, scalar_prefetch = 0 : i64, scratch_operands = 0 : i64, tpu.core_type = #tpu.core_type<tc>, window_params = [{transform_indices = @transform_0, window_bounds = array<i64: 256, 128>}, {pipeline_mode = #tpu.pipeline_mode<synchronous>, transform_indices = @transform_1, window_bounds = array<i64: 128, 128>}, {pipeline_mode = #tpu.pipeline_mode<synchronous>, transform_indices = @transform_2, window_bounds = array<i64: 128, 128>}, {transform_indices = @transform_3, window_bounds = array<i64: 256, 128>}]} {
    %c0 = arith.constant 0 : index
    %c0_0 = arith.constant 0 : index
    %0 = vector.load %arg1[%c0, %c0_0] : memref<256x128xbf16, #tpu.memory_space<vmem>>, vector<256x128xbf16>
    %c0_1 = arith.constant 0 : index
    %c0_2 = arith.constant 0 : index
    %1 = vector.load %arg2[%c0_1, %c0_2] : memref<128x128xbf16, #tpu.memory_space<vmem>>, vector<128x128xbf16>
    %cst = arith.constant dense<0.000000e+00> : vector<256x128xf32>
    %2 = tpu.matmul %0, %1, %cst {dimension_numbers = #tpu.dot_dimension_numbers<[1], [0], [0], [1], [0, 0, 1, 1], [], []>} : vector<256x128xbf16>, vector<128x128xbf16>, vector<256x128xf32> -> vector<256x128xf32>
    %3 = arith.truncf %2 : vector<256x128xf32> to vector<256x128xbf16>
    %c0_3 = arith.constant 0 : index
    %c0_4 = arith.constant 0 : index
    %4 = vector.load %arg3[%c0_3, %c0_4] : memref<128x128xbf16, #tpu.memory_space<vmem>>, vector<128x128xbf16>
    %cst_5 = arith.constant dense<0.000000e+00> : vector<256x128xf32>
    %5 = tpu.matmul %3, %4, %cst_5 {dimension_numbers = #tpu.dot_dimension_numbers<[1], [0], [0], [1], [0, 0, 1, 1], [], []>} : vector<256x128xbf16>, vector<128x128xbf16>, vector<256x128xf32> -> vector<256x128xf32>
    %c0_6 = arith.constant 0 : index
    %c0_7 = arith.constant 0 : index
    %6 = vector.load %arg4[%c0_6, %c0_7] : memref<256x128xf32, #tpu.memory_space<vmem>>, vector<256x128xf32>
    tpu.vector_store %arg4[%c0_6, %c0_7], %5 {strides = array<i32>} : memref<256x128xf32, #tpu.memory_space<vmem>>, vector<256x128xf32>,
    return
  }
  func.func @transform_0(%arg0: i32) -> (i32, i32) {
    %c0_i32 = arith.constant 0 : i32
    %c0_i32_0 = arith.constant 0 : i32
    return %arg0, %c0_i32 : i32, i32
  }
  func.func @transform_1(%arg0: i32) -> (i32, i32) {
    %c0_i32 = arith.constant 0 : i32
    %c0_i32_0 = arith.constant 0 : i32
    %c0_i32_1 = arith.constant 0 : i32
    return %c0_i32, %c0_i32_0 : i32, i32
  }
  func.func @transform_2(%arg0: i32) -> (i32, i32) {
    %c0_i32 = arith.constant 0 : i32
    %c0_i32_0 = arith.constant 0 : i32
    %c0_i32_1 = arith.constant 0 : i32
    return %c0_i32, %c0_i32_0 : i32, i32
  }
  func.func @transform_3(%arg0: i32) -> (i32, i32) {
    %c0_i32 = arith.constant 0 : i32
    %c0_i32_0 = arith.constant 0 : i32
    return %arg0, %c0_i32 : i32, i32
  }
}

</mosaic_0001>

<llo_original>
// kernel: tpu_custom_call.1
$region0: #{tpu_custom_call.1}
  #allocation0 [shape = 'u32[]', space=smem, size = 0x4, offset = 0x4, fixed_abs, tag = 'smem constant byte address 0x4 - core index']
  #allocation1 [shape = 'u32[72,128]{1,0:T(1,128)}', space=vmem, size = 0x9000, scoped, tag = 'internal scratch']
  %s0 = inlined_call_operand.hbm [shape: bf16[512,128], index: 0, kind: input, shape index: {}]
  %s1 = inlined_call_operand.hbm [shape: bf16[128,128], index: 1, kind: input, shape index: {}]
  %s2 = inlined_call_operand.hbm [shape: bf16[128,128], index: 2, kind: input, shape index: {}]
  %s3 = inlined_call_operand.hbm [shape: f32[512,128], index: 3, kind: output, shape index: {}]
  %s4 = sld [smem:[#allocation0]]
  $region57: #{tpu_custom_call.1} parent=0
    _
  %s6 = ssub.s32 1, %s4
  %s7 = scalar_select 0, %s6, %s4
  $region1: #{tpu_custom_call.1} parent=0
    #allocation2 [shape = 'u8[131072]{0}', space=vmem, size = 0x20000, scoped, tag = 'input window, operand 0']
    #allocation3 [shape = 's32[2]{0}', space=sflag, size = 0x8, scoped, tag = 'scoped memory for tpu_custom_call.1']
    #allocation4 [shape = 's32[2]{0}', space=sflag, size = 0x8, scoped, tag = 'scoped memory for tpu_custom_call.1']
    #allocation5 [shape = 'u8[32768]{0}', space=vmem, size = 0x8000, scoped, tag = 'input window, operand 1, single buffered']
    #allocation6 [shape = 's32[1]{0}', space=sflag, size = 0x4, scoped, tag = 'scoped memory for tpu_custom_call.1']
    #allocation7 [shape = 'u8[32768]{0}', space=vmem, size = 0x8000, scoped, tag = 'input window, operand 2, single buffered']
    #allocation8 [shape = 'u8[262144]{0}', space=vmem, size = 0x40000, scoped, tag = 'output window, operand 0']
    %8 = vsyncpa [#allocation3], 0
    %s9 = scalar_lea.sflag [#allocation3], 1
    %10 = vsyncpa %s9, 0
    %11 = vsyncpa [#allocation6], 0
    %12 = vsyncpa [#allocation4], 0
    %s13 = scalar_lea.sflag [#allocation4], 1
    %14 = vsyncpa %s13, 0
    loop: start=0, step=1, limit=4
    $region2: #{tpu_custom_call.1} parent=1 // loop_pre_header
      _
    $region3: #{tpu_custom_call.1} parent=1 // loop_header
      %s16 = sphi 0, %s20
      %p17 = scmp.ge.s32.totalorder %s16, 4
      %s26 = sphi 0, %s28
      %s29 = sphi 0, %s26
      %s30 = sphi 0, %s29
      %s46 = sphi 0, %s30
      %s50 = sphi 0, %s50
      %s52 = sphi 0, %s50
      %s53 = sphi 0, %s52
      %s67 = sphi 0, %s53
      %s71 = sphi 0, %s71
      %s73 = sphi 0, %s71
      %s74 = sphi 0, %s73
      %s88 = sphi 0, %s74
      %s94 = sphi 0, %s96
      %s97 = sphi 0, %s94
      %s98 = sphi 0, %s97
      %s114 = sphi 0, %s98
    $region4: #{tpu_custom_call.1} parent=1 // loop_header_branch
      %19 = sbr.rel (%p17) target = $region8
    $region5: #{tpu_custom_call.1} parent=1 // loop_body
      %s21 = ssub.s32 %s16, 1
      %s22 = ssub.s32 %s16, 2
      %s23 = sadd.s32 %s16, 1
      %s24 = ssub.s32 %s16, %s23
      %p25 = scmp.eq.s32.totalorder %s24, 0
      %s27 = sadd.s32 %s26, 1
      %s28 = scalar_select %p25, %s26, %s27
      %p31 = pneg %p25
      %p32 = scmp.eq.s32.totalorder %s16, 1
      %p33 = por %p31, %p32
      %p34 = scmp.ne.s32.totalorder %s26, %s29
      %p35 = scmp.eq.s32.totalorder %s16, 0
      %p36 = por %p34, %p35
      %p37 = scmp.ne.s32.totalorder %s26, %s29
      %p38 = scmp.eq.s32.totalorder %s21, 1
      %p39 = por %p37, %p38
      %p40 = scmp.ne.s32.totalorder %s29, %s30
      %p41 = scmp.eq.s32.totalorder %s21, 0
      %p42 = por %p40, %p41
      %p43 = scmp.ne.s32.totalorder %s29, %s30
      %p44 = scmp.eq.s32.totalorder %s22, 1
      %p45 = por %p43, %p44
      %p47 = scmp.ne.s32.totalorder %s30, %s46
      %p48 = scmp.eq.s32.totalorder %s22, 0
      %p49 = por %p47, %p48
      %s51 = sadd.s32 %s50, 1
      %p54 = scmp.eq.s32.totalorder %s16, 1
      %p55 = scmp.ne.s32.totalorder %s50, %s52
      %p56 = scmp.eq.s32.totalorder %s16, 0
      %p57 = por %p55, %p56
      %p58 = scmp.ne.s32.totalorder %s50, %s52
      %p59 = scmp.eq.s32.totalorder %s21, 1
      %p60 = por %p58, %p59
      %p61 = scmp.ne.s32.totalorder %s52, %s53
      %p62 = scmp.eq.s32.totalorder %s21, 0
      %p63 = por %p61, %p62
      %p64 = scmp.ne.s32.totalorder %s52, %s53
      %p65 = scmp.eq.s32.totalorder %s22, 1
      %p66 = por %p64, %p65
      %p68 = scmp.ne.s32.totalorder %s53, %s67
      %p69 = scmp.eq.s32.totalorder %s22, 0
      %p70 = por %p68, %p69
      %s72 = sadd.s32 %s71, 1
      %p75 = scmp.eq.s32.totalorder %s16, 1
      %p76 = scmp.ne.s32.totalorder %s71, %s73
      %p77 = scmp.eq.s32.totalorder %s16, 0
      %p78 = por %p76, %p77
      %p79 = scmp.ne.s32.totalorder %s71, %s73
      %p80 = scmp.eq.s32.totalorder %s21, 1
      %p81 = por %p79, %p80
      %p82 = scmp.ne.s32.totalorder %s73, %s74
      %p83 = scmp.eq.s32.totalorder %s21, 0
      %p84 = por %p82, %p83
      %p85 = scmp.ne.s32.totalorder %s73, %s74
      %p86 = scmp.eq.s32.totalorder %s22, 1
      %p87 = por %p85, %p86
      %p89 = scmp.ne.s32.totalorder %s74, %s88
      %p90 = scmp.eq.s32.totalorder %s22, 0
      %p91 = por %p89, %p90
      %s92 = ssub.s32 %s16, %s23
      %p93 = scmp.eq.s32.totalorder %s92, 0
      %s95 = sadd.s32 %s94, 1
      %s96 = scalar_select %p93, %s94, %s95
      %p99 = pneg %p93
      %p100 = scmp.eq.s32.totalorder %s16, 1
      %p101 = por %p99, %p100
      %p102 = scmp.ne.s32.totalorder %s94, %s97
      %p103 = scmp.eq.s32.totalorder %s16, 0
      %p104 = por %p102, %p103
      %p105 = scmp.ne.s32.totalorder %s94, %s97
      %p106 = scmp.eq.s32.totalorder %s21, 1
      %p107 = por %p105, %p106
      %p108 = scmp.ne.s32.totalorder %s97, %s98
      %p109 = scmp.eq.s32.totalorder %s21, 0
      %p110 = por %p108, %p109
      %p111 = scmp.ne.s32.totalorder %s97, %s98
      %p112 = scmp.eq.s32.totalorder %s22, 1
      %p113 = por %p111, %p112
      %p115 = scmp.ne.s32.totalorder %s98, %s114
      %p116 = scmp.eq.s32.totalorder %s22, 0
      %p117 = por %p115, %p116
      %p118 = scmp.le.s32.totalorder 1, %s16
      %p119 = scmp.lt.s32.totalorder %s16, 3
      %p120 = pnand %p118, %p119
      %p121 = pneg %p120
      // Predicated region
      $region9: #{tpu_custom_call.1} parent=5 // pred_check
        _
      $region10: #{tpu_custom_call.1} parent=5 // pred_check_branch
        %123 = sbr.rel (%p120) target = $region12
      $region11: #{tpu_custom_call.1} parent=5 // pred_region
        %s124 = ssub.s32 %s16, 1
        // Predicated region
        $region13: #{tpu_custom_call.1} parent=11 // pred_check
          %p125 = pneg %p63
        $region14: #{tpu_custom_call.1} parent=11 // pred_check_branch
          %127 = sbr.rel (%p125) target = $region16
        $region15: #{tpu_custom_call.1} parent=11 // pred_region
          %129 = vsyncadd [#allocation6], 0
          %s130 = sshll.u32 %s1, 4
          %s131 = int_to_ptr.hbm [resolvable:$true] %s130
          %s132 = sshll.u32 [#allocation5], 4
          %s133 = int_to_ptr.vmem [resolvable:$true] %s132
          %138 = dma.hbm_to_vmem [thread:$0]  %s131, 1024, %s133, [#allocation6], 64, 64, 4
        $region16: #{tpu_custom_call.1} parent=11 // pred_fallthru
          _
        // Predicated region
        $region17: #{tpu_custom_call.1} parent=11 // pred_check
          %p139 = pneg %p84
        $region18: #{tpu_custom_call.1} parent=11 // pred_check_branch
          %141 = sbr.rel (%p139) target = $region20
        $region19: #{tpu_custom_call.1} parent=11 // pred_region
          %143 = vsyncadd [#allocation6], 0
          %s144 = sshll.u32 %s2, 4
          %s145 = int_to_ptr.hbm [resolvable:$true] %s144
          %s146 = sshll.u32 [#allocation7], 4
          %s147 = int_to_ptr.vmem [resolvable:$true] %s146
          %152 = dma.hbm_to_vmem [thread:$0]  %s145, 1024, %s147, [#allocation6], 64, 64, 4
        $region20: #{tpu_custom_call.1} parent=11 // pred_fallthru
          _
      $region12: #{tpu_custom_call.1} parent=5 // pred_fallthru
        _
      %p153 = scmp.lt.s32.totalorder %s16, 2
      // Predicated region
      $region21: #{tpu_custom_call.1} parent=5 // pred_check
        %p154 = pneg %p153
      $region22: #{tpu_custom_call.1} parent=5 // pred_check_branch
        %156 = sbr.rel (%p154) target = $region24
      $region23: #{tpu_custom_call.1} parent=5 // pred_region
        // Predicated region
        $region25: #{tpu_custom_call.1} parent=23 // pred_check
          %p157 = pneg %p36
        $region26: #{tpu_custom_call.1} parent=23 // pred_check_branch
          %159 = sbr.rel (%p157) target = $region28
        $region27: #{tpu_custom_call.1} parent=23 // pred_region
          %s160 = sand.u32 %s26, 1
          %s161 = scalar_lea.sflag [#allocation3], %s160
          %s162 = sand.u32 %s26, 1
          %s163 = smul.addr %s162, 128
          %s164 = scalar_lea.vmem [#allocation2], %s163
          %s165 = smul.u32 32, %s16
          %167 = vsyncadd %s161, 0
          %s168 = smul.addr %s165, 4
          %s169 = scalar_lea.hbm %s0, %s168
          %s170 = sshll.u32 %s169, 4
          %s171 = int_to_ptr.hbm [resolvable:$true] %s170
          %s172 = sshll.u32 %s164, 4
          %s173 = int_to_ptr.vmem [resolvable:$true] %s172
          %178 = dma.hbm_to_vmem [thread:$0]  %s171, 2048, %s173, %s161, 64, 64, 4
        $region28: #{tpu_custom_call.1} parent=23 // pred_fallthru
          _
      $region24: #{tpu_custom_call.1} parent=5 // pred_fallthru
        _
      %p179 = scmp.le.s32.totalorder 1, %s16
      %p180 = scmp.lt.s32.totalorder %s16, 3
      %p181 = pnand %p179, %p180
      %p182 = pneg %p181
      // Predicated region
      $region29: #{tpu_custom_call.1} parent=5 // pred_check
        _
      $region30: #{tpu_custom_call.1} parent=5 // pred_check_branch
        %184 = sbr.rel (%p181) target = $region32
      $region31: #{tpu_custom_call.1} parent=5 // pred_region
        %s185 = ssub.s32 %s16, 1
        %s186 = sand.u32 %s29, 1
        %s187 = scalar_lea.sflag [#allocation3], %s186
        %s188 = sand.u32 %s29, 1
        %s189 = smul.addr %s188, 128
        %s190 = scalar_lea.vmem [#allocation2], %s189
        // Predicated region
        $region33: #{tpu_custom_call.1} parent=31 // pred_check
          %p191 = pneg %p42
        $region34: #{tpu_custom_call.1} parent=31 // pred_check_branch
          %193 = sbr.rel (%p191) target = $region36
        $region35: #{tpu_custom_call.1} parent=31 // pred_region
          %195 = dma.done %s187, 2048
        $region36: #{tpu_custom_call.1} parent=31 // pred_fallthru
          _
        // Predicated region
        $region37: #{tpu_custom_call.1} parent=31 // pred_check
          %p196 = pneg %p63
        $region38: #{tpu_custom_call.1} parent=31 // pred_check_branch
          %198 = sbr.rel (%p196) target = $region40
        $region39: #{tpu_custom_call.1} parent=31 // pred_region
          %200 = dma.done [#allocation6], 1024
        $region40: #{tpu_custom_call.1} parent=31 // pred_fallthru
          _
        // Predicated region
        $region41: #{tpu_custom_call.1} parent=31 // pred_check
          %p201 = pneg %p84
        $region42: #{tpu_custom_call.1} parent=31 // pred_check_branch
          %203 = sbr.rel (%p201) target = $region44
        $region43: #{tpu_custom_call.1} parent=31 // pred_region
          %205 = dma.done [#allocation6], 1024
        $region44: #{tpu_custom_call.1} parent=31 // pred_fallthru
          _
        %s206 = sand.u32 %s29, 1
        %s207 = scalar_lea.sflag [#allocation3], %s206
        %s208 = sand.u32 %s29, 1
        %s209 = smul.addr %s208, 128
        %s210 = scalar_lea.vmem [#allocation2], %s209
        %p211 = pneg %p42
        %p212 = pneg %p39
        %p213 = pneg %p63
        %p214 = pneg %p60
        %p215 = pneg %p84
        %p216 = pneg %p81
        %p217 = pneg %p110
        %p218 = pneg %p107
        %s219 = sand.u32 %s97, 1
        %s220 = scalar_lea.sflag [#allocation4], %s219
        %s221 = sand.u32 %s97, 1
        %s222 = smul.addr %s221, 256
        %s223 = scalar_lea.vmem [#allocation8], %s222
        %s224 = smul.u32 32, %s21
        %s225 = smul.u32 32, %s21
        %v226 = vld [vmem:[%s190] sm:$0xf]
        %v227 = vld [vmem:[%s190 + $0x4] sm:$0xf]
        %v228 = vld [vmem:[%s190 + $0x8] sm:$0xf]
        %v229 = vld [vmem:[%s190 + $0xc] sm:$0xf]
        %v230 = vld [vmem:[%s190 + $0x10] sm:$0xf]
        %v231 = vld [vmem:[%s190 + $0x14] sm:$0xf]
        %v232 = vld [vmem:[%s190 + $0x18] sm:$0xf]
        %v233 = vld [vmem:[%s190 + $0x1c] sm:$0xf]
        %v234 = vld [vmem:[%s190 + $0x20] sm:$0xf]
        %v235 = vld [vmem:[%s190 + $0x24] sm:$0xf]
        %v236 = vld [vmem:[%s190 + $0x28] sm:$0xf]
        %v237 = vld [vmem:[%s190 + $0x2c] sm:$0xf]
        %v238 = vld [vmem:[%s190 + $0x30] sm:$0xf]
        %v239 = vld [vmem:[%s190 + $0x34] sm:$0xf]
        %v240 = vld [vmem:[%s190 + $0x38] sm:$0xf]
        %v241 = vld [vmem:[%s190 + $0x3c] sm:$0xf]
        %v242 = vld [vmem:[%s190 + $0x40] sm:$0xf]
        %v243 = vld [vmem:[%s190 + $0x44] sm:$0xf]
        %v244 = vld [vmem:[%s190 + $0x48] sm:$0xf]
        %v245 = vld [vmem:[%s190 + $0x4c] sm:$0xf]
        %v246 = vld [vmem:[%s190 + $0x50] sm:$0xf]
        %v247 = vld [vmem:[%s190 + $0x54] sm:$0xf]
        %v248 = vld [vmem:[%s190 + $0x58] sm:$0xf]
        %v249 = vld [vmem:[%s190 + $0x5c] sm:$0xf]
        %v250 = vld [vmem:[%s190 + $0x60] sm:$0xf]
        %v251 = vld [vmem:[%s190 + $0x64] sm:$0xf]
        %v252 = vld [vmem:[%s190 + $0x68] sm:$0xf]
        %v253 = vld [vmem:[%s190 + $0x6c] sm:$0xf]
        %v254 = vld [vmem:[%s190 + $0x70] sm:$0xf]
        %v255 = vld [vmem:[%s190 + $0x74] sm:$0xf]
        %v256 = vld [vmem:[%s190 + $0x78] sm:$0xf]
        %v257 = vld [vmem:[%s190 + $0x7c] sm:$0xf]
        %v258 = vld [vmem:[#allocation5] sm:$0xf]
        %v259 = vld [vmem:[#allocation5 + $0x4] sm:$0xf]
        %v260 = vld [vmem:[#allocation5 + $0x8] sm:$0xf]
        %v261 = vld [vmem:[#allocation5 + $0xc] sm:$0xf]
        %v262 = vld [vmem:[#allocation5 + $0x10] sm:$0xf]
        %v263 = vld [vmem:[#allocation5 + $0x14] sm:$0xf]
        %v264 = vld [vmem:[#allocation5 + $0x18] sm:$0xf]
        %v265 = vld [vmem:[#allocation5 + $0x1c] sm:$0xf]
        %v266 = vld [vmem:[#allocation5 + $0x20] sm:$0xf]
        %v267 = vld [vmem:[#allocation5 + $0x24] sm:$0xf]
        %v268 = vld [vmem:[#allocation5 + $0x28] sm:$0xf]
        %v269 = vld [vmem:[#allocation5 + $0x2c] sm:$0xf]
        %v270 = vld [vmem:[#allocation5 + $0x30] sm:$0xf]
        %v271 = vld [vmem:[#allocation5 + $0x34] sm:$0xf]
        %v272 = vld [vmem:[#allocation5 + $0x38] sm:$0xf]
        %v273 = vld [vmem:[#allocation5 + $0x3c] sm:$0xf]
        %v306 = vunpack.c.l.b16 %v226
        %v307 = vunpack.c.l.b16 %v227
        %v308 = vunpack.c.l.b16 %v228
        %v309 = vunpack.c.l.b16 %v229
        %v310 = vunpack.c.l.b16 %v230
        %v311 = vunpack.c.l.b16 %v231
        %v312 = vunpack.c.l.b16 %v232
        %v313 = vunpack.c.l.b16 %v233
        %v314 = vunpack.c.l.b16 %v234
        %v315 = vunpack.c.l.b16 %v235
        %v316 = vunpack.c.l.b16 %v236
        %v317 = vunpack.c.l.b16 %v237
        %v318 = vunpack.c.l.b16 %v238
        %v319 = vunpack.c.l.b16 %v239
        %v320 = vunpack.c.l.b16 %v240
        %v321 = vunpack.c.l.b16 %v241
        %v322 = vunpack.c.l.b16 %v242
        %v323 = vunpack.c.l.b16 %v243
        %v324 = vunpack.c.l.b16 %v244
        %v325 = vunpack.c.l.b16 %v245
        %v326 = vunpack.c.l.b16 %v246
        %v327 = vunpack.c.l.b16 %v247
        %v328 = vunpack.c.l.b16 %v248
        %v329 = vunpack.c.l.b16 %v249
        %v330 = vunpack.c.l.b16 %v250
        %v331 = vunpack.c.l.b16 %v251
        %v332 = vunpack.c.l.b16 %v252
        %v333 = vunpack.c.l.b16 %v253
        %v334 = vunpack.c.l.b16 %v254
        %v335 = vunpack.c.l.b16 %v255
        %v336 = vunpack.c.l.b16 %v256
        %v337 = vunpack.c.l.b16 %v257
        %v338 = vpack.c.b16 %v307, %v306
        %v339 = vpack.c.b16 %v309, %v308
        %v340 = vpack.c.b16 %v311, %v310
        %v341 = vpack.c.b16 %v313, %v312
        %v342 = vpack.c.b16 %v315, %v314
        %v343 = vpack.c.b16 %v317, %v316
        %v344 = vpack.c.b16 %v319, %v318
        %v345 = vpack.c.b16 %v321, %v320
        %v346 = vpack.c.b16 %v323, %v322
        %v347 = vpack.c.b16 %v325, %v324
        %v348 = vpack.c.b16 %v327, %v326
        %v349 = vpack.c.b16 %v329, %v328
        %v350 = vpack.c.b16 %v331, %v330
        %v351 = vpack.c.b16 %v333, %v332
        %v352 = vpack.c.b16 %v335, %v334
        %v353 = vpack.c.b16 %v337, %v336
        %v386 = vunpack.c.l.b16 %v258
        %v387 = vunpack.c.l.b16 %v259
        %v388 = vunpack.c.l.b16 %v260
        %v389 = vunpack.c.l.b16 %v261
        %v390 = vunpack.c.l.b16 %v262
        %v391 = vunpack.c.l.b16 %v263
        %v392 = vunpack.c.l.b16 %v264
        %v393 = vunpack.c.l.b16 %v265
        %v394 = vunpack.c.l.b16 %v266
        %v395 = vunpack.c.l.b16 %v267
        %v396 = vunpack.c.l.b16 %v268
        %v397 = vunpack.c.l.b16 %v269
        %v398 = vunpack.c.l.b16 %v270
        %v399 = vunpack.c.l.b16 %v271
        %v400 = vunpack.c.l.b16 %v272
        %v401 = vunpack.c.l.b16 %v273
        %v402 = vpack.c.b16 %v387, %v386
        %v403 = vpack.c.b16 %v389, %v388
        %v404 = vpack.c.b16 %v391, %v390
        %v405 = vpack.c.b16 %v393, %v392
        %v406 = vpack.c.b16 %v395, %v394
        %v407 = vpack.c.b16 %v397, %v396
        %v408 = vpack.c.b16 %v399, %v398
        %v409 = vpack.c.b16 %v401, %v400
        %418 = vmatpush.bf16.msra.mxu0 %v409
        %419 = vmatpush.bf16.msra.mxu0 %v408
        %420 = vmatpush.bf16.msra.mxu0 %v407
        %421 = vmatpush.bf16.msra.mxu0 %v406
        %422 = vmatpush.bf16.msra.mxu0 %v405
        %423 = vmatpush.bf16.msra.mxu0 %v404
        %424 = vmatpush.bf16.msra.mxu0 %v403
        %425 = vmatpush.bf16.msra.mxu0 %v402
        %426 = vmatmul.bf16.gmra.mxu0 %v338
        %v427 = vpop.f32.mrf.mxu0
        %v428 = vadd.f32 0.0, %v427
        %v429 = vpop.f32.mrf.mxu0
        %v430 = vadd.f32 0.0, %v429
        %431 = vmatmul.bf16.gmra.mxu0 %v339
        %v432 = vpop.f32.mrf.mxu0
        %v433 = vadd.f32 0.0, %v432
        %v434 = vpop.f32.mrf.mxu0
        %v435 = vadd.f32 0.0, %v434
        %436 = vmatmul.bf16.gmra.mxu0 %v340
        %v437 = vpop.f32.mrf.mxu0
        %v438 = vadd.f32 0.0, %v437
        %v439 = vpop.f32.mrf.mxu0
        %v440 = vadd.f32 0.0, %v439
        %441 = vmatmul.bf16.gmra.mxu0 %v341
        %v442 = vpop.f32.mrf.mxu0
        %v443 = vadd.f32 0.0, %v442
        %v444 = vpop.f32.mrf.mxu0
        %v445 = vadd.f32 0.0, %v444
        %446 = vmatmul.bf16.gmra.mxu0 %v342
        %v447 = vpop.f32.mrf.mxu0
        %v448 = vadd.f32 0.0, %v447
        %v449 = vpop.f32.mrf.mxu0
        %v450 = vadd.f32 0.0, %v449
        %451 = vmatmul.bf16.gmra.mxu0 %v343
        %v452 = vpop.f32.mrf.mxu0
        %v453 = vadd.f32 0.0, %v452
        %v454 = vpop.f32.mrf.mxu0
        %v455 = vadd.f32 0.0, %v454
        %456 = vmatmul.bf16.gmra.mxu0 %v344
        %v457 = vpop.f32.mrf.mxu0
        %v458 = vadd.f32 0.0, %v457
        %v459 = vpop.f32.mrf.mxu0
        %v460 = vadd.f32 0.0, %v459
        %461 = vmatmul.bf16.gmra.mxu0 %v345
        %v462 = vpop.f32.mrf.mxu0
        %v463 = vadd.f32 0.0, %v462
        %v464 = vpop.f32.mrf.mxu0
        %v465 = vadd.f32 0.0, %v464
        %466 = vmatmul.bf16.gmra.mxu0 %v346
        %v467 = vpop.f32.mrf.mxu0
        %v468 = vadd.f32 0.0, %v467
        %v469 = vpop.f32.mrf.mxu0
        %v470 = vadd.f32 0.0, %v469
        %471 = vmatmul.bf16.gmra.mxu0 %v347
        %v472 = vpop.f32.mrf.mxu0
        %v473 = vadd.f32 0.0, %v472
        %v474 = vpop.f32.mrf.mxu0
        %v475 = vadd.f32 0.0, %v474
        %476 = vmatmul.bf16.gmra.mxu0 %v348
        %v477 = vpop.f32.mrf.mxu0
        %v478 = vadd.f32 0.0, %v477
        %v479 = vpop.f32.mrf.mxu0
        %v480 = vadd.f32 0.0, %v479
        %481 = vmatmul.bf16.gmra.mxu0 %v349
        %v482 = vpop.f32.mrf.mxu0
        %v483 = vadd.f32 0.0, %v482
        %v484 = vpop.f32.mrf.mxu0
        %v485 = vadd.f32 0.0, %v484
        %486 = vmatmul.bf16.gmra.mxu0 %v350
        %v487 = vpop.f32.mrf.mxu0
        %v488 = vadd.f32 0.0, %v487
        %v489 = vpop.f32.mrf.mxu0
        %v490 = vadd.f32 0.0, %v489
        %491 = vmatmul.bf16.gmra.mxu0 %v351
        %v492 = vpop.f32.mrf.mxu0
        %v493 = vadd.f32 0.0, %v492
        %v494 = vpop.f32.mrf.mxu0
        %v495 = vadd.f32 0.0, %v494
        %496 = vmatmul.bf16.gmra.mxu0 %v352
        %v497 = vpop.f32.mrf.mxu0
        %v498 = vadd.f32 0.0, %v497
        %v499 = vpop.f32.mrf.mxu0
        %v500 = vadd.f32 0.0, %v499
        %501 = vmatmul.bf16.gmra.mxu0 %v353
        %v502 = vpop.f32.mrf.mxu0
        %v503 = vadd.f32 0.0, %v502
        %v504 = vpop.f32.mrf.mxu0
        %v505 = vadd.f32 0.0, %v504
        %506 = vdwg.mxu0
        %v507 = vpack.c.bf16 %v430, %v428
        %v508 = vpack.c.bf16 %v435, %v433
        %v509 = vpack.c.bf16 %v440, %v438
        %v510 = vpack.c.bf16 %v445, %v443
        %v511 = vpack.c.bf16 %v450, %v448
        %v512 = vpack.c.bf16 %v455, %v453
        %v513 = vpack.c.bf16 %v460, %v458
        %v514 = vpack.c.bf16 %v465, %v463
        %v515 = vpack.c.bf16 %v470, %v468
        %v516 = vpack.c.bf16 %v475, %v473
        %v517 = vpack.c.bf16 %v480, %v478
        %v518 = vpack.c.bf16 %v485, %v483
        %v519 = vpack.c.bf16 %v490, %v488
        %v520 = vpack.c.bf16 %v495, %v493
        %v521 = vpack.c.bf16 %v500, %v498
        %v522 = vpack.c.bf16 %v505, %v503
        %v523 = vld [vmem:[#allocation7] sm:$0xf]
        %v524 = vld [vmem:[#allocation7 + $0x4] sm:$0xf]
        %v525 = vld [vmem:[#allocation7 + $0x8] sm:$0xf]
        %v526 = vld [vmem:[#allocation7 + $0xc] sm:$0xf]
        %v527 = vld [vmem:[#allocation7 + $0x10] sm:$0xf]
        %v528 = vld [vmem:[#allocation7 + $0x14] sm:$0xf]
        %v529 = vld [vmem:[#allocation7 + $0x18] sm:$0xf]
        %v530 = vld [vmem:[#allocation7 + $0x1c] sm:$0xf]
        %v531 = vld [vmem:[#allocation7 + $0x20] sm:$0xf]
        %v532 = vld [vmem:[#allocation7 + $0x24] sm:$0xf]
        %v533 = vld [vmem:[#allocation7 + $0x28] sm:$0xf]
        %v534 = vld [vmem:[#allocation7 + $0x2c] sm:$0xf]
        %v535 = vld [vmem:[#allocation7 + $0x30] sm:$0xf]
        %v536 = vld [vmem:[#allocation7 + $0x34] sm:$0xf]
        %v537 = vld [vmem:[#allocation7 + $0x38] sm:$0xf]
        %v538 = vld [vmem:[#allocation7 + $0x3c] sm:$0xf]
        %v555 = vunpack.c.l.b16 %v523
        %v556 = vunpack.c.l.b16 %v524
        %v557 = vunpack.c.l.b16 %v525
        %v558 = vunpack.c.l.b16 %v526
        %v559 = vunpack.c.l.b16 %v527
        %v560 = vunpack.c.l.b16 %v528
        %v561 = vunpack.c.l.b16 %v529
        %v562 = vunpack.c.l.b16 %v530
        %v563 = vunpack.c.l.b16 %v531
        %v564 = vunpack.c.l.b16 %v532
        %v565 = vunpack.c.l.b16 %v533
        %v566 = vunpack.c.l.b16 %v534
        %v567 = vunpack.c.l.b16 %v535
        %v568 = vunpack.c.l.b16 %v536
        %v569 = vunpack.c.l.b16 %v537
        %v570 = vunpack.c.l.b16 %v538
        %v571 = vpack.c.b16 %v556, %v555
        %v572 = vpack.c.b16 %v558, %v557
        %v573 = vpack.c.b16 %v560, %v559
        %v574 = vpack.c.b16 %v562, %v561
        %v575 = vpack.c.b16 %v564, %v563
        %v576 = vpack.c.b16 %v566, %v565
        %v577 = vpack.c.b16 %v568, %v567
        %v578 = vpack.c.b16 %v570, %v569
        %587 = vmatpush.bf16.msra.mxu0 %v578
        %588 = vmatpush.bf16.msra.mxu0 %v577
        %589 = vmatpush.bf16.msra.mxu0 %v576
        %590 = vmatpush.bf16.msra.mxu0 %v575
        %591 = vmatpush.bf16.msra.mxu0 %v574
        %592 = vmatpush.bf16.msra.mxu0 %v573
        %593 = vmatpush.bf16.msra.mxu0 %v572
        %594 = vmatpush.bf16.msra.mxu0 %v571
        %595 = vmatmul.bf16.gmra.mxu0 %v507
        %v596 = vpop.f32.mrf.mxu0
        %v597 = vadd.f32 0.0, %v596
        %v598 = vpop.f32.mrf.mxu0
        %v599 = vadd.f32 0.0, %v598
        %600 = vmatmul.bf16.gmra.mxu0 %v508
        %v601 = vpop.f32.mrf.mxu0
        %v602 = vadd.f32 0.0, %v601
        %v603 = vpop.f32.mrf.mxu0
        %v604 = vadd.f32 0.0, %v603
        %605 = vmatmul.bf16.gmra.mxu0 %v509
        %v606 = vpop.f32.mrf.mxu0
        %v607 = vadd.f32 0.0, %v606
        %v608 = vpop.f32.mrf.mxu0
        %v609 = vadd.f32 0.0, %v608
        %610 = vmatmul.bf16.gmra.mxu0 %v510
        %v611 = vpop.f32.mrf.mxu0
        %v612 = vadd.f32 0.0, %v611
        %v613 = vpop.f32.mrf.mxu0
        %v614 = vadd.f32 0.0, %v613
        %615 = vmatmul.bf16.gmra.mxu0 %v511
        %v616 = vpop.f32.mrf.mxu0
        %v617 = vadd.f32 0.0, %v616
        %v618 = vpop.f32.mrf.mxu0
        %v619 = vadd.f32 0.0, %v618
        %620 = vmatmul.bf16.gmra.mxu0 %v512
        %v621 = vpop.f32.mrf.mxu0
        %v622 = vadd.f32 0.0, %v621
        %v623 = vpop.f32.mrf.mxu0
        %v624 = vadd.f32 0.0, %v623
        %625 = vmatmul.bf16.gmra.mxu0 %v513
        %v626 = vpop.f32.mrf.mxu0
        %v627 = vadd.f32 0.0, %v626
        %v628 = vpop.f32.mrf.mxu0
        %v629 = vadd.f32 0.0, %v628
        %630 = vmatmul.bf16.gmra.mxu0 %v514
        %v631 = vpop.f32.mrf.mxu0
        %v632 = vadd.f32 0.0, %v631
        %v633 = vpop.f32.mrf.mxu0
        %v634 = vadd.f32 0.0, %v633
        %635 = vmatmul.bf16.gmra.mxu0 %v515
        %v636 = vpop.f32.mrf.mxu0
        %v637 = vadd.f32 0.0, %v636
        %v638 = vpop.f32.mrf.mxu0
        %v639 = vadd.f32 0.0, %v638
        %640 = vmatmul.bf16.gmra.mxu0 %v516
        %v641 = vpop.f32.mrf.mxu0
        %v642 = vadd.f32 0.0, %v641
        %v643 = vpop.f32.mrf.mxu0
        %v644 = vadd.f32 0.0, %v643
        %645 = vmatmul.bf16.gmra.mxu0 %v517
        %v646 = vpop.f32.mrf.mxu0
        %v647 = vadd.f32 0.0, %v646
        %v648 = vpop.f32.mrf.mxu0
        %v649 = vadd.f32 0.0, %v648
        %650 = vmatmul.bf16.gmra.mxu0 %v518
        %v651 = vpop.f32.mrf.mxu0
        %v652 = vadd.f32 0.0, %v651
        %v653 = vpop.f32.mrf.mxu0
        %v654 = vadd.f32 0.0, %v653
        %655 = vmatmul.bf16.gmra.mxu0 %v519
        %v656 = vpop.f32.mrf.mxu0
        %v657 = vadd.f32 0.0, %v656
        %v658 = vpop.f32.mrf.mxu0
        %v659 = vadd.f32 0.0, %v658
        %660 = vmatmul.bf16.gmra.mxu0 %v520
        %v661 = vpop.f32.mrf.mxu0
        %v662 = vadd.f32 0.0, %v661
        %v663 = vpop.f32.mrf.mxu0
        %v664 = vadd.f32 0.0, %v663
        %665 = vmatmul.bf16.gmra.mxu0 %v521
        %v666 = vpop.f32.mrf.mxu0
        %v667 = vadd.f32 0.0, %v666
        %v668 = vpop.f32.mrf.mxu0
        %v669 = vadd.f32 0.0, %v668
        %670 = vmatmul.bf16.gmra.mxu0 %v522
        %v671 = vpop.f32.mrf.mxu0
        %v672 = vadd.f32 0.0, %v671
        %v673 = vpop.f32.mrf.mxu0
        %v674 = vadd.f32 0.0, %v673
        %675 = vdwg.mxu0
        %676 = vst [vmem:[%s223] sm:$0xff] %v597
        %677 = vst [vmem:[%s223 + $0x8] sm:$0xff] %v599
        %678 = vst [vmem:[%s223 + $0x10] sm:$0xff] %v602
        %679 = vst [vmem:[%s223 + $0x18] sm:$0xff] %v604
        %680 = vst [vmem:[%s223 + $0x20] sm:$0xff] %v607
        %681 = vst [vmem:[%s223 + $0x28] sm:$0xff] %v609
        %682 = vst [vmem:[%s223 + $0x30] sm:$0xff] %v612
        %683 = vst [vmem:[%s223 + $0x38] sm:$0xff] %v614
        %684 = vst [vmem:[%s223 + $0x40] sm:$0xff] %v617
        %685 = vst [vmem:[%s223 + $0x48] sm:$0xff] %v619
        %686 = vst [vmem:[%s223 + $0x50] sm:$0xff] %v622
        %687 = vst [vmem:[%s223 + $0x58] sm:$0xff] %v624
        %688 = vst [vmem:[%s223 + $0x60] sm:$0xff] %v627
        %689 = vst [vmem:[%s223 + $0x68] sm:$0xff] %v629
        %690 = vst [vmem:[%s223 + $0x70] sm:$0xff] %v632
        %691 = vst [vmem:[%s223 + $0x78] sm:$0xff] %v634
        %692 = vst [vmem:[%s223 + $0x80] sm:$0xff] %v637
        %693 = vst [vmem:[%s223 + $0x88] sm:$0xff] %v639
        %694 = vst [vmem:[%s223 + $0x90] sm:$0xff] %v642
        %695 = vst [vmem:[%s223 + $0x98] sm:$0xff] %v644
        %696 = vst [vmem:[%s223 + $0xa0] sm:$0xff] %v647
        %697 = vst [vmem:[%s223 + $0xa8] sm:$0xff] %v649
        %698 = vst [vmem:[%s223 + $0xb0] sm:$0xff] %v652
        %699 = vst [vmem:[%s223 + $0xb8] sm:$0xff] %v654
        %700 = vst [vmem:[%s223 + $0xc0] sm:$0xff] %v657
        %701 = vst [vmem:[%s223 + $0xc8] sm:$0xff] %v659
        %702 = vst [vmem:[%s223 + $0xd0] sm:$0xff] %v662
        %703 = vst [vmem:[%s223 + $0xd8] sm:$0xff] %v664
        %704 = vst [vmem:[%s223 + $0xe0] sm:$0xff] %v667
        %705 = vst [vmem:[%s223 + $0xe8] sm:$0xff] %v669
        %706 = vst [vmem:[%s223 + $0xf0] sm:$0xff] %v672
        %707 = vst [vmem:[%s223 + $0xf8] sm:$0xff] %v674
        %s708 = sand.u32 %s97, 1
        %s709 = scalar_lea.sflag [#allocation4], %s708
        %s710 = sand.u32 %s97, 1
        %s711 = smul.addr %s710, 256
        %s712 = scalar_lea.vmem [#allocation8], %s711
        // Predicated region
        $region45: #{tpu_custom_call.1} parent=31 // pred_check
          %p713 = pneg %p107
        $region46: #{tpu_custom_call.1} parent=31 // pred_check_branch
          %715 = sbr.rel (%p713) target = $region48
        $region47: #{tpu_custom_call.1} parent=31 // pred_region
          %s716 = smul.u32 32, %s21
          %718 = vsyncadd %s709, 0
          %s719 = smul.addr %s716, 8
          %s720 = scalar_lea.hbm %s3, %s719
          %s721 = sshll.u32 %s712, 4
          %s722 = int_to_ptr.vmem [resolvable:$true] %s721
          %s723 = sshll.u32 %s720, 4
          %s724 = int_to_ptr.hbm [resolvable:$true] %s723
          %729 = dma.vmem_to_hbm [thread:$0]  %s722, 4096, %s724, %s709, 128, 128, 8
        $region48: #{tpu_custom_call.1} parent=31 // pred_fallthru
          _
      $region32: #{tpu_custom_call.1} parent=5 // pred_fallthru
        _
      %p730 = scmp.le.s32.totalorder 2, %s16
      // Predicated region
      $region49: #{tpu_custom_call.1} parent=5 // pred_check
        %p731 = pneg %p730
      $region50: #{tpu_custom_call.1} parent=5 // pred_check_branch
        %733 = sbr.rel (%p731) target = $region52
      $region51: #{tpu_custom_call.1} parent=5 // pred_region
        %s734 = ssub.s32 %s16, 2
        // Predicated region
        $region53: #{tpu_custom_call.1} parent=51 // pred_check
          %p735 = pneg %p113
        $region54: #{tpu_custom_call.1} parent=51 // pred_check_branch
          %737 = sbr.rel (%p735) target = $region56
        $region55: #{tpu_custom_call.1} parent=51 // pred_region
          %s738 = sand.u32 %s98, 1
          %s739 = scalar_lea.sflag [#allocation4], %s738
          %s740 = sand.u32 %s98, 1
          %s741 = smul.addr %s740, 256
          %s742 = scalar_lea.vmem [#allocation8], %s741
          %744 = dma.done %s739, 4096
        $region56: #{tpu_custom_call.1} parent=51 // pred_fallthru
          _
      $region52: #{tpu_custom_call.1} parent=5 // pred_fallthru
        _
    $region6: #{tpu_custom_call.1} parent=1 // loop_footer
      %s20 = sadd.s32 1, %s16
    $region7: #{tpu_custom_call.1} parent=1 // loop_footer_branch
      %15 = sbr.rel target = $region3
    $region8: #{tpu_custom_call.1} parent=1 // loop_exit
      _
    %745 = vsyncpa [#allocation3], 1
    %s746 = scalar_lea.sflag [#allocation3], 1
    %747 = vsyncpa %s746, 1
    %748 = vsyncpa [#allocation6], 1
    %749 = vsyncpa [#allocation4], 1
    %s750 = scalar_lea.sflag [#allocation4], 1
    %751 = vsyncpa %s750, 1

</llo_original>
